<compile_context>
chip_gen: v6e
topology: v6e:2x2x1
jax: 0.10.0
libtpu: 0.0.40
codegen_flags: <defaults>
</compile_context>

<pallas_src>
import numpy as np

import jax
import jax.numpy as jnp
from jax.experimental import pallas as pl
from jax.experimental.pallas import tpu as pltpu


# ----------------------------------------------------------------------------
# Fused kernel: relu(relu(relu(relu(x@W1+b1)@W2+b2)@Wf1+bf1)@Wf2+bf2) -> fc3+sigmoid
# ----------------------------------------------------------------------------
def _fused_cnn_kernel(x_ref, w1_ref, b1_ref, w2_ref, b2_ref,
                      wfc1_ref, bfc1_ref, wfc2_ref, bfc2_ref,
                      wfc3_ref, bfc3_ref, o_ref):
    f32 = jnp.float32
    bf16 = jnp.bfloat16

    # conv1 as banded matmul (+bias, ReLU).  (B, L) @ (L, 16L) -> (B, 16L)
    a = jnp.dot(x_ref[...].astype(bf16), w1_ref[...], preferred_element_type=f32)
    a = jnp.maximum(a + b1_ref[...], 0.0)

    # conv2 as banded matmul.  (B, 16L) @ (16L, 32L) -> (B, 32L)
    a = jnp.dot(a.astype(bf16), w2_ref[...], preferred_element_type=f32)
    a = jnp.maximum(a + b2_ref[...], 0.0)

    # fc1: activation columns are already in PyTorch view(B, 32*L) order.
    a = jnp.dot(a.astype(bf16), wfc1_ref[...], preferred_element_type=f32)
    a = jnp.maximum(a + bfc1_ref[...], 0.0)

    # fc2
    a = jnp.dot(a.astype(bf16), wfc2_ref[...], preferred_element_type=f32)
    a = jnp.maximum(a + bfc2_ref[...], 0.0)

    # fc3 (64 -> 1) as a VPU/XLU lane reduction + numerically stable sigmoid.
    logit = jnp.sum(a * wfc3_ref[...], axis=-1, keepdims=True) + bfc3_ref[...]
    pos = 1.0 / (1.0 + jnp.exp(-logit))     # selected when logit >= 0
    ez = jnp.exp(logit)
    neg = ez / (1.0 + ez)                   # selected when logit <  0
    o_ref[...] = jnp.where(logit >= 0.0, pos, neg).astype(o_ref.dtype)


# ----------------------------------------------------------------------------
# One-time weight packing (outside the jit-hot path).
# ----------------------------------------------------------------------------
def _banded_conv1d_weight(w, L):
    """Conv1d(k=3, pad=1) weight (Cout, Cin, 3) -> dense banded matrix
    (Cin*L, Cout*L) so that conv is `act @ W` with feature index c*L + l
    (PyTorch C-major flatten order)."""
    w_np = np.asarray(w, np.float32)
    Cout, Cin, K = w_np.shape
    big = np.zeros((Cin * L, Cout * L), np.float32)
    rows_base = np.arange(Cin) * L
    cols_base = np.arange(Cout) * L
    for l in range(L):
        for t in range(K):
            i = l + t - 1                      # padding = 1
            if 0 <= i < L:
                big[np.ix_(rows_base + i, cols_base + l)] = w_np[:, :, t].T
    return big


def pack_params(params, input_size):
    L = int(input_size)
    W1 = _banded_conv1d_weight(params["w_conv1"], L)        # (L, 16L)
    W2 = _banded_conv1d_weight(params["w_conv2"], L)        # (16L, 32L)
    b1v = np.repeat(np.asarray(params["b_conv1"], np.float32), L)[None, :]
    b2v = np.repeat(np.asarray(params["b_conv2"], np.float32), L)[None, :]
    return dict(
        w1=jnp.asarray(W1, jnp.bfloat16),
        b1=jnp.asarray(b1v, jnp.float32),
        w2=jnp.asarray(W2, jnp.bfloat16),
        b2=jnp.asarray(b2v, jnp.float32),
        wfc1=jnp.asarray(params["w_fc1"], jnp.bfloat16),               # (32L, 128)
        bfc1=jnp.asarray(params["b_fc1"], jnp.float32)[None, :],       # (1, 128)
        wfc2=jnp.asarray(params["w_fc2"], jnp.bfloat16),               # (128, 64)
        bfc2=jnp.asarray(params["b_fc2"], jnp.float32)[None, :],       # (1, 64)
        wfc3=jnp.asarray(params["w_fc3"], jnp.float32).T,              # (1, 64)
        bfc3=jnp.asarray(params["b_fc3"], jnp.float32)[None, :],       # (1, 1)
    )


# ----------------------------------------------------------------------------
# Forward pass (single pallas_call).
# ----------------------------------------------------------------------------
def simple_cnn_forward(packed, x):
    B, L = x.shape
    n1, n2 = 16 * L, 32 * L
    block_b = B if B <= 256 else 256           # batch tile (parallel grid axis)
    grid = (pl.cdiv(B, block_b),)

    flops = 2 * B * (L * n1 + n1 * n2 + n2 * 128 + 128 * 64 + 64)
    bytes_accessed = int(x.size * 4 + B * 4 +
                         sum(v.size * v.dtype.itemsize for v in packed.values()))
    cost = pl.CostEstimate(flops=int(flops), transcendentals=2 * B,
                           bytes_accessed=bytes_accessed)

    bcast = lambda i: (0, 0)                   # weights: same block every step
    return pl.pallas_call(
        _fused_cnn_kernel,
        out_shape=jax.ShapeDtypeStruct((B, 1), jnp.float32),
        grid=grid,
        in_specs=[
            pl.BlockSpec((block_b, L), lambda i: (i, 0)),   # x
            pl.BlockSpec((L, n1), bcast),                   # W1 (banded conv1)
            pl.BlockSpec((1, n1), bcast),                   # b1
            pl.BlockSpec((n1, n2), bcast),                  # W2 (banded conv2)
            pl.BlockSpec((1, n2), bcast),                   # b2
            pl.BlockSpec((n2, 128), bcast),                 # fc1 W
            pl.BlockSpec((1, 128), bcast),                  # fc1 b
            pl.BlockSpec((128, 64), bcast),                 # fc2 W
            pl.BlockSpec((1, 64), bcast),                   # fc2 b
            pl.BlockSpec((1, 64), bcast),                   # fc3 W (row)
            pl.BlockSpec((1, 1), bcast),                    # fc3 b
        ],
        out_specs=pl.BlockSpec((block_b, 1), lambda i: (i, 0)),
        compiler_params=pltpu.CompilerParams(dimension_semantics=("parallel",)),
        cost_estimate=cost,
    )(x.astype(jnp.float32), packed["w1"], packed["b1"], packed["w2"], packed["b2"],
      packed["wfc1"], packed["bfc1"], packed["wfc2"], packed["bfc2"],
      packed["wfc3"], packed["bfc3"])


# ----------------------------------------------------------------------------
# Parameter init (deterministic, PyTorch-default-like uniform(-1/sqrt(fan_in))).
# ----------------------------------------------------------------------------
def _uniform(key, shape, fan_in):
    bound = 1.0 / jnp.sqrt(jnp.float32(fan_in))
    return jax.random.uniform(key, shape, jnp.float32, -bound, bound)


def init_params(key, input_size):
    ks = jax.random.split(key, 10)
    p = {}
    p["w_conv1"] = _uniform(ks[0], (16, 1, 3), 1 * 3)
    p["b_conv1"] = _uniform(ks[1], (16,), 1 * 3)
    p["w_conv2"] = _uniform(ks[2], (32, 16, 3), 16 * 3)
    p["b_conv2"] = _uniform(ks[3], (32,), 16 * 3)
    p["w_fc1"] = _uniform(ks[4], (32 * input_size, 128), 32 * input_size)
    p["b_fc1"] = _uniform(ks[5], (128,), 32 * input_size)
    p["w_fc2"] = _uniform(ks[6], (128, 64), 128)
    p["b_fc2"] = _uniform(ks[7], (64,), 128)
    p["w_fc3"] = _uniform(ks[8], (64, 1), 64)
    p["b_fc3"] = _uniform(ks[9], (1,), 64)
    return p


# Pure-JAX f32 reference (mirrors PyTorch SimpleCNN.forward exactly).
def _reference_forward(params, x):
    B, L = x.shape
    h = x[:, None, :]                                           # (B, 1, L)

    def conv1d(h, w, b):
        hp = jnp.pad(h, ((0, 0), (0, 0), (1, 1)))
        cols = jnp.stack([hp[:, :, t:t + L] for t in range(3)], axis=-1)
        return jnp.einsum("bilt,oit->bol", cols, w) + b[None, :, None]

    h = jax.nn.relu(conv1d(h, params["w_conv1"], params["b_conv1"]))
    h = jax.nn.relu(conv1d(h, params["w_conv2"], params["b_conv2"]))
    h = h.reshape(B, -1)                                        # C-major flatten
    h = jax.nn.relu(h @ params["w_fc1"] + params["b_fc1"])
    h = jax.nn.relu(h @ params["w_fc2"] + params["b_fc2"])
    return jax.nn.sigmoid(h @ params["w_fc3"] + params["b_fc3"])


if __name__ == "__main__":
    BATCH = 2
    INPUT_SIZE = 16  # small stand-in for the default 69

    key = jax.random.PRNGKey(0)
    k_params, k_x = jax.random.split(key)
    params = init_params(k_params, INPUT_SIZE)
    packed = pack_params(params, INPUT_SIZE)            # one-time weight packing
    x = jax.random.normal(k_x, (BATCH, INPUT_SIZE), jnp.float32)

    fwd = jax.jit(simple_cnn_forward)
    out = jax.block_until_ready(fwd(packed, x))

    assert out.shape == (BATCH, 1), out.shape
    assert bool(jnp.all(jnp.isfinite(out)))
    assert bool(jnp.all((out >= 0.0) & (out <= 1.0)))
    ref = _reference_forward(params, x)
    assert float(jnp.max(jnp.abs(out - ref))) < 0.1     # bf16-matmul tolerance
    print("KERNEL_OK")
</pallas_src>

<mosaic_0001>
module attributes {stable_mosaic.version = 11 : i64} {
  func.func @_fused_cnn_kernel(%arg0: i32, %arg1: memref<2x16xf32, #tpu.memory_space<vmem>>, %arg2: memref<16x256xbf16, #tpu.memory_space<vmem>>, %arg3: memref<1x256xf32, #tpu.memory_space<vmem>>, %arg4: memref<256x512xbf16, #tpu.memory_space<vmem>>, %arg5: memref<1x512xf32, #tpu.memory_space<vmem>>, %arg6: memref<512x128xbf16, #tpu.memory_space<vmem>>, %arg7: memref<1x128xf32, #tpu.memory_space<vmem>>, %arg8: memref<128x64xbf16, #tpu.memory_space<vmem>>, %arg9: memref<1x64xf32, #tpu.memory_space<vmem>>, %arg10: memref<1x64xf32, #tpu.memory_space<vmem>>, %arg11: memref<1x1xf32, #tpu.memory_space<vmem>>, %arg12: memref<2x1xf32, #tpu.memory_space<vmem>>) attributes {dimension_semantics = [#tpu.dimension_semantics<parallel>], iteration_bounds = array<i64: 1>, scalar_prefetch = 0 : i64, scratch_operands = 0 : i64, tpu.core_type = #tpu.core_type<tc>, window_params = [{transform_indices = @transform_0, window_bounds = array<i64: 2, 16>}, {pipeline_mode = #tpu.pipeline_mode<synchronous>, transform_indices = @transform_1, window_bounds = array<i64: 16, 256>}, {pipeline_mode = #tpu.pipeline_mode<synchronous>, transform_indices = @transform_2, window_bounds = array<i64: 1, 256>}, {pipeline_mode = #tpu.pipeline_mode<synchronous>, transform_indices = @transform_3, window_bounds = array<i64: 256, 512>}, {pipeline_mode = #tpu.pipeline_mode<synchronous>, transform_indices = @transform_4, window_bounds = array<i64: 1, 512>}, {pipeline_mode = #tpu.pipeline_mode<synchronous>, transform_indices = @transform_5, window_bounds = array<i64: 512, 128>}, {pipeline_mode = #tpu.pipeline_mode<synchronous>, transform_indices = @transform_6, window_bounds = array<i64: 1, 128>}, {pipeline_mode = #tpu.pipeline_mode<synchronous>, transform_indices = @transform_7, window_bounds = array<i64: 128, 64>}, {pipeline_mode = #tpu.pipeline_mode<synchronous>, transform_indices = @transform_8, window_bounds = array<i64: 1, 64>}, {pipeline_mode = #tpu.pipeline_mode<synchronous>, transform_indices = @transform_9, window_bounds = array<i64: 1, 64>}, {pipeline_mode = #tpu.pipeline_mode<synchronous>, transform_indices = @transform_10, window_bounds = array<i64: 1, 1>}, {transform_indices = @transform_11, window_bounds = array<i64: 2, 1>}]} {
    %c0 = arith.constant 0 : index
    %c0_0 = arith.constant 0 : index
    %0 = vector.load %arg1[%c0, %c0_0] : memref<2x16xf32, #tpu.memory_space<vmem>>, vector<2x16xf32>
    %1 = arith.truncf %0 : vector<2x16xf32> to vector<2x16xbf16>
    %c0_1 = arith.constant 0 : index
    %c0_2 = arith.constant 0 : index
    %2 = vector.load %arg2[%c0_1, %c0_2] : memref<16x256xbf16, #tpu.memory_space<vmem>>, vector<16x256xbf16>
    %cst = arith.constant dense<0.000000e+00> : vector<2x256xf32>
    %3 = tpu.matmul %1, %2, %cst {dimension_numbers = #tpu.dot_dimension_numbers<[1], [0], [0], [1], [0, 0, 1, 1], [], []>} : vector<2x16xbf16>, vector<16x256xbf16>, vector<2x256xf32> -> vector<2x256xf32>
    %c0_3 = arith.constant 0 : index
    %c0_4 = arith.constant 0 : index
    %4 = vector.load %arg3[%c0_3, %c0_4] : memref<1x256xf32, #tpu.memory_space<vmem>>, vector<1x256xf32>
    %5 = vector.broadcast %4 : vector<1x256xf32> to vector<2x256xf32>
    %6 = arith.addf %3, %5 : vector<2x256xf32>
    %cst_5 = arith.constant 0.000000e+00 : f32
    %7 = vector.broadcast %cst_5 : f32 to vector<2x256xf32>
    %8 = arith.maximumf %6, %7 : vector<2x256xf32>
    %9 = arith.truncf %8 : vector<2x256xf32> to vector<2x256xbf16>
    %c0_6 = arith.constant 0 : index
    %c0_7 = arith.constant 0 : index
    %10 = vector.load %arg4[%c0_6, %c0_7] : memref<256x512xbf16, #tpu.memory_space<vmem>>, vector<256x512xbf16>
    %cst_8 = arith.constant dense<0.000000e+00> : vector<2x512xf32>
    %11 = tpu.matmul %9, %10, %cst_8 {dimension_numbers = #tpu.dot_dimension_numbers<[1], [0], [0], [1], [0, 0, 1, 1], [], []>} : vector<2x256xbf16>, vector<256x512xbf16>, vector<2x512xf32> -> vector<2x512xf32>
    %c0_9 = arith.constant 0 : index
    %c0_10 = arith.constant 0 : index
    %12 = vector.load %arg5[%c0_9, %c0_10] : memref<1x512xf32, #tpu.memory_space<vmem>>, vector<1x512xf32>
    %13 = vector.broadcast %12 : vector<1x512xf32> to vector<2x512xf32>
    %14 = arith.addf %11, %13 : vector<2x512xf32>
    %cst_11 = arith.constant 0.000000e+00 : f32
    %15 = vector.broadcast %cst_11 : f32 to vector<2x512xf32>
    %16 = arith.maximumf %14, %15 : vector<2x512xf32>
    %17 = arith.truncf %16 : vector<2x512xf32> to vector<2x512xbf16>
    %c0_12 = arith.constant 0 : index
    %c0_13 = arith.constant 0 : index
    %18 = vector.load %arg6[%c0_12, %c0_13] : memref<512x128xbf16, #tpu.memory_space<vmem>>, vector<512x128xbf16>
    %cst_14 = arith.constant dense<0.000000e+00> : vector<2x128xf32>
    %19 = tpu.matmul %17, %18, %cst_14 {dimension_numbers = #tpu.dot_dimension_numbers<[1], [0], [0], [1], [0, 0, 1, 1], [], []>} : vector<2x512xbf16>, vector<512x128xbf16>, vector<2x128xf32> -> vector<2x128xf32>
    %c0_15 = arith.constant 0 : index
    %c0_16 = arith.constant 0 : index
    %20 = vector.load %arg7[%c0_15, %c0_16] : memref<1x128xf32, #tpu.memory_space<vmem>>, vector<1x128xf32>
    %21 = vector.broadcast %20 : vector<1x128xf32> to vector<2x128xf32>
    %22 = arith.addf %19, %21 : vector<2x128xf32>
    %cst_17 = arith.constant 0.000000e+00 : f32
    %23 = vector.broadcast %cst_17 : f32 to vector<2x128xf32>
    %24 = arith.maximumf %22, %23 : vector<2x128xf32>
    %25 = arith.truncf %24 : vector<2x128xf32> to vector<2x128xbf16>
    %c0_18 = arith.constant 0 : index
    %c0_19 = arith.constant 0 : index
    %26 = vector.load %arg8[%c0_18, %c0_19] : memref<128x64xbf16, #tpu.memory_space<vmem>>, vector<128x64xbf16>
    %cst_20 = arith.constant dense<0.000000e+00> : vector<2x64xf32>
    %27 = tpu.matmul %25, %26, %cst_20 {dimension_numbers = #tpu.dot_dimension_numbers<[1], [0], [0], [1], [0, 0, 1, 1], [], []>} : vector<2x128xbf16>, vector<128x64xbf16>, vector<2x64xf32> -> vector<2x64xf32>
    %c0_21 = arith.constant 0 : index
    %c0_22 = arith.constant 0 : index
    %28 = vector.load %arg9[%c0_21, %c0_22] : memref<1x64xf32, #tpu.memory_space<vmem>>, vector<1x64xf32>
    %29 = vector.broadcast %28 : vector<1x64xf32> to vector<2x64xf32>
    %30 = arith.addf %27, %29 : vector<2x64xf32>
    %cst_23 = arith.constant 0.000000e+00 : f32
    %31 = vector.broadcast %cst_23 : f32 to vector<2x64xf32>
    %32 = arith.maximumf %30, %31 : vector<2x64xf32>
    %c0_24 = arith.constant 0 : index
    %c0_25 = arith.constant 0 : index
    %33 = vector.load %arg10[%c0_24, %c0_25] : memref<1x64xf32, #tpu.memory_space<vmem>>, vector<1x64xf32>
    %34 = vector.broadcast %33 : vector<1x64xf32> to vector<2x64xf32>
    %35 = arith.mulf %32, %34 : vector<2x64xf32>
    %cst_26 = arith.constant dense<0.000000e+00> : vector<2xf32>
    %36 = vector.multi_reduction <add>, %35, %cst_26 [1] : vector<2x64xf32> to vector<2xf32>
    %37 = vector.shape_cast %36 : vector<2xf32> to vector<2x1xf32>
    %c0_27 = arith.constant 0 : index
    %c0_28 = arith.constant 0 : index
    %38 = vector.load %arg11[%c0_27, %c0_28] : memref<1x1xf32, #tpu.memory_space<vmem>>, vector<1x1xf32>
    %39 = vector.broadcast %38 : vector<1x1xf32> to vector<2x1xf32>
    %40 = arith.addf %37, %39 : vector<2x1xf32>
    %cst_29 = arith.constant 0.000000e+00 : f32
    %41 = vector.broadcast %cst_29 : f32 to vector<2x1xf32>
    %42 = arith.subf %41, %40 : vector<2x1xf32>
    %43 = math.exp %42 : vector<2x1xf32>
    %cst_30 = arith.constant 1.000000e+00 : f32
    %44 = vector.broadcast %cst_30 : f32 to vector<2x1xf32>
    %45 = arith.addf %44, %43 : vector<2x1xf32>
    %cst_31 = arith.constant 1.000000e+00 : f32
    %46 = vector.broadcast %cst_31 : f32 to vector<2x1xf32>
    %47 = arith.divf %46, %45 : vector<2x1xf32>
    %48 = math.exp %40 : vector<2x1xf32>
    %cst_32 = arith.constant 1.000000e+00 : f32
    %49 = vector.broadcast %cst_32 : f32 to vector<2x1xf32>
    %50 = arith.addf %49, %48 : vector<2x1xf32>
    %51 = arith.divf %48, %50 : vector<2x1xf32>
    %cst_33 = arith.constant 0.000000e+00 : f32
    %52 = vector.broadcast %cst_33 : f32 to vector<2x1xf32>
    %53 = arith.cmpf oge, %40, %52 : vector<2x1xf32>
    %54 = arith.select %53, %47, %51 : vector<2x1xi1>, vector<2x1xf32>
    %c0_34 = arith.constant 0 : index
    %c0_35 = arith.constant 0 : index
    %55 = vector.load %arg12[%c0_34, %c0_35] : memref<2x1xf32, #tpu.memory_space<vmem>>, vector<2x1xf32>
    tpu.vector_store %arg12[%c0_34, %c0_35], %54 {strides = array<i32>} : memref<2x1xf32, #tpu.memory_space<vmem>>, vector<2x1xf32>,
    return
  }
  func.func @transform_0(%arg0: i32) -> (i32, i32) {
    %c0_i32 = arith.constant 0 : i32
    %c0_i32_0 = arith.constant 0 : i32
    return %arg0, %c0_i32 : i32, i32
  }
  func.func @transform_1(%arg0: i32) -> (i32, i32) {
    %c0_i32 = arith.constant 0 : i32
    %c0_i32_0 = arith.constant 0 : i32
    %c0_i32_1 = arith.constant 0 : i32
    return %c0_i32, %c0_i32_0 : i32, i32
  }
  func.func @transform_2(%arg0: i32) -> (i32, i32) {
    %c0_i32 = arith.constant 0 : i32
    %c0_i32_0 = arith.constant 0 : i32
    %c0_i32_1 = arith.constant 0 : i32
    return %c0_i32, %c0_i32_0 : i32, i32
  }
  func.func @transform_3(%arg0: i32) -> (i32, i32) {
    %c0_i32 = arith.constant 0 : i32
    %c0_i32_0 = arith.constant 0 : i32
    %c0_i32_1 = arith.constant 0 : i32
    return %c0_i32, %c0_i32_0 : i32, i32
  }
  func.func @transform_4(%arg0: i32) -> (i32, i32) {
    %c0_i32 = arith.constant 0 : i32
    %c0_i32_0 = arith.constant 0 : i32
    %c0_i32_1 = arith.constant 0 : i32
    return %c0_i32, %c0_i32_0 : i32, i32
  }
  func.func @transform_5(%arg0: i32) -> (i32, i32) {
    %c0_i32 = arith.constant 0 : i32
    %c0_i32_0 = arith.constant 0 : i32
    %c0_i32_1 = arith.constant 0 : i32
    return %c0_i32, %c0_i32_0 : i32, i32
  }
  func.func @transform_6(%arg0: i32) -> (i32, i32) {
    %c0_i32 = arith.constant 0 : i32
    %c0_i32_0 = arith.constant 0 : i32
    %c0_i32_1 = arith.constant 0 : i32
    return %c0_i32, %c0_i32_0 : i32, i32
  }
  func.func @transform_7(%arg0: i32) -> (i32, i32) {
    %c0_i32 = arith.constant 0 : i32
    %c0_i32_0 = arith.constant 0 : i32
    %c0_i32_1 = arith.constant 0 : i32
    return %c0_i32, %c0_i32_0 : i32, i32
  }
  func.func @transform_8(%arg0: i32) -> (i32, i32) {
    %c0_i32 = arith.constant 0 : i32
    %c0_i32_0 = arith.constant 0 : i32
    %c0_i32_1 = arith.constant 0 : i32
    return %c0_i32, %c0_i32_0 : i32, i32
  }
  func.func @transform_9(%arg0: i32) -> (i32, i32) {
    %c0_i32 = arith.constant 0 : i32
    %c0_i32_0 = arith.constant 0 : i32
    %c0_i32_1 = arith.constant 0 : i32
    return %c0_i32, %c0_i32_0 : i32, i32
  }
  func.func @transform_10(%arg0: i32) -> (i32, i32) {
    %c0_i32 = arith.constant 0 : i32
    %c0_i32_0 = arith.constant 0 : i32
    %c0_i32_1 = arith.constant 0 : i32
    return %c0_i32, %c0_i32_0 : i32, i32
  }
  func.func @transform_11(%arg0: i32) -> (i32, i32) {
    %c0_i32 = arith.constant 0 : i32
    %c0_i32_0 = arith.constant 0 : i32
    return %arg0, %c0_i32 : i32, i32
  }
}

</mosaic_0001>

<llo_original>
// kernel: simple_cnn_forward.1
$region0: #{simple_cnn_forward.1}
  #allocation0 [shape = 'u32[]', space=smem, size = 0x4, offset = 0x4, fixed_abs, tag = 'smem constant byte address 0x4 - core index']
  #allocation1 [shape = 'u32[144,128]{1,0:T(1,128)}', space=vmem, size = 0x12000, scoped, tag = 'internal scratch']
  #allocation2 [shape = 'f32[1,1]{1,0:T(1,128)S(1)}', space=vmem, size = 0x200, scoped, tag = 'scoped memory for simple_cnn_forward.1']
  %s0 = inlined_call_operand.vmem [shape: f32[2,16], index: 0, kind: input, shape index: {}]
  %s1 = inlined_call_operand.vmem [shape: bf16[16,256], index: 1, kind: input, shape index: {}]
  %s2 = inlined_call_operand.vmem [shape: f32[1,256], index: 2, kind: input, shape index: {}]
  %s3 = inlined_call_operand.hbm [shape: bf16[256,512], index: 3, kind: input, shape index: {}]
  %s4 = inlined_call_operand.vmem [shape: f32[1,512], index: 4, kind: input, shape index: {}]
  %s5 = inlined_call_operand.hbm [shape: bf16[512,128], index: 5, kind: input, shape index: {}]
  %s6 = inlined_call_operand.vmem [shape: f32[1,128], index: 6, kind: input, shape index: {}]
  %s7 = inlined_call_operand.vmem [shape: bf16[128,64], index: 7, kind: input, shape index: {}]
  %s8 = inlined_call_operand.vmem [shape: f32[1,64], index: 8, kind: input, shape index: {}]
  %s9 = inlined_call_operand.vmem [shape: f32[1,64], index: 9, kind: input, shape index: {}]
  %s10 = inlined_call_operand.<no memory space> [shape: f32[1,1], index: 10, kind: input, shape index: {}]
  %s11 = inlined_call_operand.vmem [shape: f32[2,1], index: 11, kind: output, shape index: {}]
  %s12 = sld [smem:[#allocation0]]
  $region62: #{simple_cnn_forward.1} parent=0
    _
  %s14 = ssub.s32 1, %s12
  %s15 = scalar_select 0, %s14, %s12
  %v16 = vstv %s10
  %17 = vst [vmem:[#allocation2] sm:$0x1] %v16
  $region1: #{simple_cnn_forward.1} parent=0
    #allocation3 [shape = 'u8[262144]{0}', space=vmem, size = 0x40000, scoped, tag = 'input window, operand 3, single buffered']
    #allocation4 [shape = 's32[1]{0}', space=sflag, size = 0x4, scoped, tag = 'scoped memory for simple_cnn_forward.1']
    #allocation5 [shape = 'u8[131072]{0}', space=vmem, size = 0x20000, scoped, tag = 'input window, operand 5, single buffered']
    #allocation6 [shape = 's32[1]{0}', space=sflag, size = 0x4, scoped, tag = 'scoped memory for simple_cnn_forward.1']
    %18 = vsyncpa [#allocation4], 0
    %19 = vsyncpa [#allocation6], 0
    // Predicated region
    $region2: #{simple_cnn_forward.1} parent=1 // pred_check
      _
    $region3: #{simple_cnn_forward.1} parent=1 // pred_check_branch
      %21 = sbr.rel (0) target = $region5
    $region4: #{simple_cnn_forward.1} parent=1 // pred_region
      _
    $region5: #{simple_cnn_forward.1} parent=1 // pred_fallthru
      _
    // Predicated region
    $region6: #{simple_cnn_forward.1} parent=1 // pred_check
      _
    $region7: #{simple_cnn_forward.1} parent=1 // pred_check_branch
      %23 = sbr.rel (0) target = $region9
    $region8: #{simple_cnn_forward.1} parent=1 // pred_region
      _
    $region9: #{simple_cnn_forward.1} parent=1 // pred_fallthru
      _
    // Predicated region
    $region10: #{simple_cnn_forward.1} parent=1 // pred_check
      _
    $region11: #{simple_cnn_forward.1} parent=1 // pred_check_branch
      %25 = sbr.rel (0) target = $region13
    $region12: #{simple_cnn_forward.1} parent=1 // pred_region
      _
    $region13: #{simple_cnn_forward.1} parent=1 // pred_fallthru
      _
    // Predicated region
    $region14: #{simple_cnn_forward.1} parent=1 // pred_check
      _
    $region15: #{simple_cnn_forward.1} parent=1 // pred_check_branch
      %27 = sbr.rel (0) target = $region17
    $region16: #{simple_cnn_forward.1} parent=1 // pred_region
      %s29 = ssub.s32 8192, 8192
      %30 = vsyncadd [#allocation4], %s29
      %s31 = sshll.u32 [#allocation3], 4
      %s32 = int_to_ptr.vmem [resolvable:$true] %s31
      %37 = dma.hbm_to_vmem [thread:$0]  %s3, 8192, %s32, [#allocation4], 256, 256, 16
    $region17: #{simple_cnn_forward.1} parent=1 // pred_fallthru
      _
    // Predicated region
    $region18: #{simple_cnn_forward.1} parent=1 // pred_check
      _
    $region19: #{simple_cnn_forward.1} parent=1 // pred_check_branch
      %39 = sbr.rel (0) target = $region21
    $region20: #{simple_cnn_forward.1} parent=1 // pred_region
      _
    $region21: #{simple_cnn_forward.1} parent=1 // pred_fallthru
      _
    // Predicated region
    $region22: #{simple_cnn_forward.1} parent=1 // pred_check
      _
    $region23: #{simple_cnn_forward.1} parent=1 // pred_check_branch
      %41 = sbr.rel (0) target = $region25
    $region24: #{simple_cnn_forward.1} parent=1 // pred_region
      %s43 = ssub.s32 4096, 4096
      %44 = vsyncadd [#allocation6], %s43
      %s45 = sshll.u32 [#allocation5], 4
      %s46 = int_to_ptr.vmem [resolvable:$true] %s45
      %51 = dma.hbm_to_vmem [thread:$0]  %s5, 4096, %s46, [#allocation6], 64, 64, 4
    $region25: #{simple_cnn_forward.1} parent=1 // pred_fallthru
      _
    // Predicated region
    $region26: #{simple_cnn_forward.1} parent=1 // pred_check
      _
    $region27: #{simple_cnn_forward.1} parent=1 // pred_check_branch
      %53 = sbr.rel (0) target = $region29
    $region28: #{simple_cnn_forward.1} parent=1 // pred_region
      _
    $region29: #{simple_cnn_forward.1} parent=1 // pred_fallthru
      _
    // Predicated region
    $region30: #{simple_cnn_forward.1} parent=1 // pred_check
      _
    $region31: #{simple_cnn_forward.1} parent=1 // pred_check_branch
      %55 = sbr.rel (0) target = $region33
    $region32: #{simple_cnn_forward.1} parent=1 // pred_region
      _
    $region33: #{simple_cnn_forward.1} parent=1 // pred_fallthru
      _
    // Predicated region
    $region34: #{simple_cnn_forward.1} parent=1 // pred_check
      _
    $region35: #{simple_cnn_forward.1} parent=1 // pred_check_branch
      %57 = sbr.rel (0) target = $region37
    $region36: #{simple_cnn_forward.1} parent=1 // pred_region
      _
    $region37: #{simple_cnn_forward.1} parent=1 // pred_fallthru
      _
    // Predicated region
    $region38: #{simple_cnn_forward.1} parent=1 // pred_check
      _
    $region39: #{simple_cnn_forward.1} parent=1 // pred_check_branch
      %59 = sbr.rel (0) target = $region41
    $region40: #{simple_cnn_forward.1} parent=1 // pred_region
      _
    $region41: #{simple_cnn_forward.1} parent=1 // pred_fallthru
      _
    // Predicated region
    $region42: #{simple_cnn_forward.1} parent=1 // pred_check
      _
    $region43: #{simple_cnn_forward.1} parent=1 // pred_check_branch
      %61 = sbr.rel (0) target = $region45
    $region44: #{simple_cnn_forward.1} parent=1 // pred_region
      _
    $region45: #{simple_cnn_forward.1} parent=1 // pred_fallthru
      _
    // Predicated region
    $region46: #{simple_cnn_forward.1} parent=1 // pred_check
      _
    $region47: #{simple_cnn_forward.1} parent=1 // pred_check_branch
      %63 = sbr.rel (0) target = $region49
    $region48: #{simple_cnn_forward.1} parent=1 // pred_region
      %64 = dma.done [#allocation4], 8192
    $region49: #{simple_cnn_forward.1} parent=1 // pred_fallthru
      _
    // Predicated region
    $region50: #{simple_cnn_forward.1} parent=1 // pred_check
      _
    $region51: #{simple_cnn_forward.1} parent=1 // pred_check_branch
      %66 = sbr.rel (0) target = $region53
    $region52: #{simple_cnn_forward.1} parent=1 // pred_region
      %67 = dma.done [#allocation6], 4096
    $region53: #{simple_cnn_forward.1} parent=1 // pred_fallthru
      _
    %v69 = vld [vmem:[%s0] sm:$0x3]
    %v70 = vpack.c.bf16 %v69, %v69
    %v71 = vld [vmem:[%s1] sm:$0xff]
    %v72 = vld [vmem:[%s1 + $0x8] sm:$0xff]
    %v73 = vld [vmem:[%s2] sm:$0x3]
    %v75 = vlaneseq
    %v76 = vshrl.u32 %v75, 7
    %v77 = vsub.s32 0, %v76
    %v78 = vrot.slane %v73, %v77
    %v79 = vlaneseq
    %v80 = vshrl.u32 %v79, 7
    %v81 = vsub.s32 1, %v80
    %v82 = vrot.slane %v73, %v81
    %v87 = vunpack.c.l.b16 %v71
    %v88 = vunpack.c.h.b16 %v71
    %v89 = vunpack.c.l.b16 %v72
    %v90 = vunpack.c.h.b16 %v72
    %v91 = vpack.c.b16 %v89, %v87
    %v92 = vpack.c.b16 %v90, %v88
    %vm95 = vcmask 130048
    %v97 = vsel %vm95, %v70, 0
    %99 = vmatprep.subr.bf16.mxu0 0
    %100 = vmatpush1.bf16.msra.mxu0 0
    %101 = vmatprep.subr.bf16.mxu0 0
    %102 = vmatpush1.bf16.msra.mxu0 0
    %103 = vmatprep.subr.bf16.mxu0 0
    %104 = vmatpush1.bf16.msra.mxu0 0
    %105 = vmatprep.subr.bf16.mxu0 0
    %106 = vmatpush1.bf16.msra.mxu0 0
    %107 = vmatprep.subr.bf16.mxu0 0
    %108 = vmatpush1.bf16.msra.mxu0 0
    %109 = vmatprep.subr.bf16.mxu0 0
    %110 = vmatpush1.bf16.msra.mxu0 0
    %111 = vmatprep.subr.bf16.mxu0 0
    %112 = vmatpush1.bf16.msra.mxu0 0
    %113 = vmatprep.subr.bf16.mxu0 %v92
    %114 = vmatpush1.bf16.msra.mxu0 %v91
    %115 = vmatprep.subr.bf16.mxu0 0
    %116 = vmatpush2.bf16.msra.mxu0 0
    %117 = vmatprep.subr.bf16.mxu0 0
    %118 = vmatpush2.bf16.msra.mxu0 0
    %119 = vmatprep.subr.bf16.mxu0 0
    %120 = vmatpush2.bf16.msra.mxu0 0
    %121 = vmatprep.subr.bf16.mxu0 0
    %122 = vmatpush2.bf16.msra.mxu0 0
    %123 = vmatprep.subr.bf16.mxu0 0
    %124 = vmatpush2.bf16.msra.mxu0 0
    %125 = vmatprep.subr.bf16.mxu0 0
    %126 = vmatpush2.bf16.msra.mxu0 0
    %127 = vmatprep.subr.bf16.mxu0 0
    %128 = vmatpush2.bf16.msra.mxu0 0
    %129 = vmatprep.subr.bf16.mxu0 0
    %130 = vmatpush2.bf16.msra.mxu0 0
    %131 = vmatprep.mubr.bf16.mxu0 0
    %132 = vmatmul.mubr.bf16.gmra.mxu0 %v97
    %v133 = vpop.f32.mrf.mxu0
    %v134 = vadd.f32 %v78, %v133
    %v135 = vpop.f32.mrf.mxu0
    %v136 = vadd.f32 %v82, %v135
    %v137 = vpop.f32.mrf.mxu0
    %v138 = vpop.f32.mrf.mxu0
    %139 = vdwg.mxu0
    %v140 = vmax.f32 %v134, 0.0
    %v141 = vmax.f32 %v136, 0.0
    %v142 = vpack.c.bf16 %v140, %v140
    %v143 = vpack.c.bf16 %v141, %v141
    %v144 = vld [vmem:[#allocation3] sm:$0xff]
    %v145 = vld [vmem:[#allocation3 + $0x8] sm:$0xff]
    %v146 = vld [vmem:[#allocation3 + $0x10] sm:$0xff]
    %v147 = vld [vmem:[#allocation3 + $0x18] sm:$0xff]
    %v148 = vld [vmem:[#allocation3 + $0x20] sm:$0xff]
    %v149 = vld [vmem:[#allocation3 + $0x28] sm:$0xff]
    %v150 = vld [vmem:[#allocation3 + $0x30] sm:$0xff]
    %v151 = vld [vmem:[#allocation3 + $0x38] sm:$0xff]
    %v152 = vld [vmem:[#allocation3 + $0x40] sm:$0xff]
    %v153 = vld [vmem:[#allocation3 + $0x48] sm:$0xff]
    %v154 = vld [vmem:[#allocation3 + $0x50] sm:$0xff]
    %v155 = vld [vmem:[#allocation3 + $0x58] sm:$0xff]
    %v156 = vld [vmem:[#allocation3 + $0x60] sm:$0xff]
    %v157 = vld [vmem:[#allocation3 + $0x68] sm:$0xff]
    %v158 = vld [vmem:[#allocation3 + $0x70] sm:$0xff]
    %v159 = vld [vmem:[#allocation3 + $0x78] sm:$0xff]
    %v160 = vld [vmem:[#allocation3 + $0x80] sm:$0xff]
    %v161 = vld [vmem:[#allocation3 + $0x88] sm:$0xff]
    %v162 = vld [vmem:[#allocation3 + $0x90] sm:$0xff]
    %v163 = vld [vmem:[#allocation3 + $0x98] sm:$0xff]
    %v164 = vld [vmem:[#allocation3 + $0xa0] sm:$0xff]
    %v165 = vld [vmem:[#allocation3 + $0xa8] sm:$0xff]
    %v166 = vld [vmem:[#allocation3 + $0xb0] sm:$0xff]
    %v167 = vld [vmem:[#allocation3 + $0xb8] sm:$0xff]
    %v168 = vld [vmem:[#allocation3 + $0xc0] sm:$0xff]
    %v169 = vld [vmem:[#allocation3 + $0xc8] sm:$0xff]
    %v170 = vld [vmem:[#allocation3 + $0xd0] sm:$0xff]
    %v171 = vld [vmem:[#allocation3 + $0xd8] sm:$0xff]
    %v172 = vld [vmem:[#allocation3 + $0xe0] sm:$0xff]
    %v173 = vld [vmem:[#allocation3 + $0xe8] sm:$0xff]
    %v174 = vld [vmem:[#allocation3 + $0xf0] sm:$0xff]
    %v175 = vld [vmem:[#allocation3 + $0xf8] sm:$0xff]
    %v176 = vld [vmem:[#allocation3 + $0x100] sm:$0xff]
    %v177 = vld [vmem:[#allocation3 + $0x108] sm:$0xff]
    %v178 = vld [vmem:[#allocation3 + $0x110] sm:$0xff]
    %v179 = vld [vmem:[#allocation3 + $0x118] sm:$0xff]
    %v180 = vld [vmem:[#allocation3 + $0x120] sm:$0xff]
    %v181 = vld [vmem:[#allocation3 + $0x128] sm:$0xff]
    %v182 = vld [vmem:[#allocation3 + $0x130] sm:$0xff]
    %v183 = vld [vmem:[#allocation3 + $0x138] sm:$0xff]
    %v184 = vld [vmem:[#allocation3 + $0x140] sm:$0xff]
    %v185 = vld [vmem:[#allocation3 + $0x148] sm:$0xff]
    %v186 = vld [vmem:[#allocation3 + $0x150] sm:$0xff]
    %v187 = vld [vmem:[#allocation3 + $0x158] sm:$0xff]
    %v188 = vld [vmem:[#allocation3 + $0x160] sm:$0xff]
    %v189 = vld [vmem:[#allocation3 + $0x168] sm:$0xff]
    %v190 = vld [vmem:[#allocation3 + $0x170] sm:$0xff]
    %v191 = vld [vmem:[#allocation3 + $0x178] sm:$0xff]
    %v192 = vld [vmem:[#allocation3 + $0x180] sm:$0xff]
    %v193 = vld [vmem:[#allocation3 + $0x188] sm:$0xff]
    %v194 = vld [vmem:[#allocation3 + $0x190] sm:$0xff]
    %v195 = vld [vmem:[#allocation3 + $0x198] sm:$0xff]
    %v196 = vld [vmem:[#allocation3 + $0x1a0] sm:$0xff]
    %v197 = vld [vmem:[#allocation3 + $0x1a8] sm:$0xff]
    %v198 = vld [vmem:[#allocation3 + $0x1b0] sm:$0xff]
    %v199 = vld [vmem:[#allocation3 + $0x1b8] sm:$0xff]
    %v200 = vld [vmem:[#allocation3 + $0x1c0] sm:$0xff]
    %v201 = vld [vmem:[#allocation3 + $0x1c8] sm:$0xff]
    %v202 = vld [vmem:[#allocation3 + $0x1d0] sm:$0xff]
    %v203 = vld [vmem:[#allocation3 + $0x1d8] sm:$0xff]
    %v204 = vld [vmem:[#allocation3 + $0x1e0] sm:$0xff]
    %v205 = vld [vmem:[#allocation3 + $0x1e8] sm:$0xff]
    %v206 = vld [vmem:[#allocation3 + $0x1f0] sm:$0xff]
    %v207 = vld [vmem:[#allocation3 + $0x1f8] sm:$0xff]
    %v208 = vld [vmem:[%s4] sm:$0xf]
    %v210 = vlaneseq
    %v211 = vshrl.u32 %v210, 7
    %v212 = vsub.s32 0, %v211
    %v213 = vrot.slane %v208, %v212
    %v214 = vlaneseq
    %v215 = vshrl.u32 %v214, 7
    %v216 = vsub.s32 1, %v215
    %v217 = vrot.slane %v208, %v216
    %v218 = vlaneseq
    %v219 = vshrl.u32 %v218, 7
    %v220 = vsub.s32 2, %v219
    %v221 = vrot.slane %v208, %v220
    %v222 = vlaneseq
    %v223 = vshrl.u32 %v222, 7
    %v224 = vsub.s32 3, %v223
    %v225 = vrot.slane %v208, %v224
    %v294 = vunpack.c.l.b16 %v144
    %v295 = vunpack.c.h.b16 %v144
    %v296 = vunpack.c.l.b16 %v145
    %v297 = vunpack.c.h.b16 %v145
    %v298 = vunpack.c.l.b16 %v146
    %v299 = vunpack.c.h.b16 %v146
    %v300 = vunpack.c.l.b16 %v147
    %v301 = vunpack.c.h.b16 %v147
    %v302 = vunpack.c.l.b16 %v148
    %v303 = vunpack.c.h.b16 %v148
    %v304 = vunpack.c.l.b16 %v149
    %v305 = vunpack.c.h.b16 %v149
    %v306 = vunpack.c.l.b16 %v150
    %v307 = vunpack.c.h.b16 %v150
    %v308 = vunpack.c.l.b16 %v151
    %v309 = vunpack.c.h.b16 %v151
    %v310 = vunpack.c.l.b16 %v152
    %v311 = vunpack.c.h.b16 %v152
    %v312 = vunpack.c.l.b16 %v153
    %v313 = vunpack.c.h.b16 %v153
    %v314 = vunpack.c.l.b16 %v154
    %v315 = vunpack.c.h.b16 %v154
    %v316 = vunpack.c.l.b16 %v155
    %v317 = vunpack.c.h.b16 %v155
    %v318 = vunpack.c.l.b16 %v156
    %v319 = vunpack.c.h.b16 %v156
    %v320 = vunpack.c.l.b16 %v157
    %v321 = vunpack.c.h.b16 %v157
    %v322 = vunpack.c.l.b16 %v158
    %v323 = vunpack.c.h.b16 %v158
    %v324 = vunpack.c.l.b16 %v159
    %v325 = vunpack.c.h.b16 %v159
    %v326 = vunpack.c.l.b16 %v160
    %v327 = vunpack.c.h.b16 %v160
    %v328 = vunpack.c.l.b16 %v161
    %v329 = vunpack.c.h.b16 %v161
    %v330 = vunpack.c.l.b16 %v162
    %v331 = vunpack.c.h.b16 %v162
    %v332 = vunpack.c.l.b16 %v163
    %v333 = vunpack.c.h.b16 %v163
    %v334 = vunpack.c.l.b16 %v164
    %v335 = vunpack.c.h.b16 %v164
    %v336 = vunpack.c.l.b16 %v165
    %v337 = vunpack.c.h.b16 %v165
    %v338 = vunpack.c.l.b16 %v166
    %v339 = vunpack.c.h.b16 %v166
    %v340 = vunpack.c.l.b16 %v167
    %v341 = vunpack.c.h.b16 %v167
    %v342 = vunpack.c.l.b16 %v168
    %v343 = vunpack.c.h.b16 %v168
    %v344 = vunpack.c.l.b16 %v169
    %v345 = vunpack.c.h.b16 %v169
    %v346 = vunpack.c.l.b16 %v170
    %v347 = vunpack.c.h.b16 %v170
    %v348 = vunpack.c.l.b16 %v171
    %v349 = vunpack.c.h.b16 %v171
    %v350 = vunpack.c.l.b16 %v172
    %v351 = vunpack.c.h.b16 %v172
    %v352 = vunpack.c.l.b16 %v173
    %v353 = vunpack.c.h.b16 %v173
    %v354 = vunpack.c.l.b16 %v174
    %v355 = vunpack.c.h.b16 %v174
    %v356 = vunpack.c.l.b16 %v175
    %v357 = vunpack.c.h.b16 %v175
    %v358 = vunpack.c.l.b16 %v176
    %v359 = vunpack.c.h.b16 %v176
    %v360 = vunpack.c.l.b16 %v177
    %v361 = vunpack.c.h.b16 %v177
    %v362 = vunpack.c.l.b16 %v178
    %v363 = vunpack.c.h.b16 %v178
    %v364 = vunpack.c.l.b16 %v179
    %v365 = vunpack.c.h.b16 %v179
    %v366 = vunpack.c.l.b16 %v180
    %v367 = vunpack.c.h.b16 %v180
    %v368 = vunpack.c.l.b16 %v181
    %v369 = vunpack.c.h.b16 %v181
    %v370 = vunpack.c.l.b16 %v182
    %v371 = vunpack.c.h.b16 %v182
    %v372 = vunpack.c.l.b16 %v183
    %v373 = vunpack.c.h.b16 %v183
    %v374 = vunpack.c.l.b16 %v184
    %v375 = vunpack.c.h.b16 %v184
    %v376 = vunpack.c.l.b16 %v185
    %v377 = vunpack.c.h.b16 %v185
    %v378 = vunpack.c.l.b16 %v186
    %v379 = vunpack.c.h.b16 %v186
    %v380 = vunpack.c.l.b16 %v187
    %v381 = vunpack.c.h.b16 %v187
    %v382 = vunpack.c.l.b16 %v188
    %v383 = vunpack.c.h.b16 %v188
    %v384 = vunpack.c.l.b16 %v189
    %v385 = vunpack.c.h.b16 %v189
    %v386 = vunpack.c.l.b16 %v190
    %v387 = vunpack.c.h.b16 %v190
    %v388 = vunpack.c.l.b16 %v191
    %v389 = vunpack.c.h.b16 %v191
    %v390 = vunpack.c.l.b16 %v192
    %v391 = vunpack.c.h.b16 %v192
    %v392 = vunpack.c.l.b16 %v193
    %v393 = vunpack.c.h.b16 %v193
    %v394 = vunpack.c.l.b16 %v194
    %v395 = vunpack.c.h.b16 %v194
    %v396 = vunpack.c.l.b16 %v195
    %v397 = vunpack.c.h.b16 %v195
    %v398 = vunpack.c.l.b16 %v196
    %v399 = vunpack.c.h.b16 %v196
    %v400 = vunpack.c.l.b16 %v197
    %v401 = vunpack.c.h.b16 %v197
    %v402 = vunpack.c.l.b16 %v198
    %v403 = vunpack.c.h.b16 %v198
    %v404 = vunpack.c.l.b16 %v199
    %v405 = vunpack.c.h.b16 %v199
    %v406 = vunpack.c.l.b16 %v200
    %v407 = vunpack.c.h.b16 %v200
    %v408 = vunpack.c.l.b16 %v201
    %v409 = vunpack.c.h.b16 %v201
    %v410 = vunpack.c.l.b16 %v202
    %v411 = vunpack.c.h.b16 %v202
    %v412 = vunpack.c.l.b16 %v203
    %v413 = vunpack.c.h.b16 %v203
    %v414 = vunpack.c.l.b16 %v204
    %v415 = vunpack.c.h.b16 %v204
    %v416 = vunpack.c.l.b16 %v205
    %v417 = vunpack.c.h.b16 %v205
    %v418 = vunpack.c.l.b16 %v206
    %v419 = vunpack.c.h.b16 %v206
    %v420 = vunpack.c.l.b16 %v207
    %v421 = vunpack.c.h.b16 %v207
    %v422 = vpack.c.b16 %v298, %v294
    %v423 = vpack.c.b16 %v299, %v295
    %v424 = vpack.c.b16 %v300, %v296
    %v425 = vpack.c.b16 %v301, %v297
    %v426 = vpack.c.b16 %v306, %v302
    %v427 = vpack.c.b16 %v307, %v303
    %v428 = vpack.c.b16 %v308, %v304
    %v429 = vpack.c.b16 %v309, %v305
    %v430 = vpack.c.b16 %v314, %v310
    %v431 = vpack.c.b16 %v315, %v311
    %v432 = vpack.c.b16 %v316, %v312
    %v433 = vpack.c.b16 %v317, %v313
    %v434 = vpack.c.b16 %v322, %v318
    %v435 = vpack.c.b16 %v323, %v319
    %v436 = vpack.c.b16 %v324, %v320
    %v437 = vpack.c.b16 %v325, %v321
    %v438 = vpack.c.b16 %v330, %v326
    %v439 = vpack.c.b16 %v331, %v327
    %v440 = vpack.c.b16 %v332, %v328
    %v441 = vpack.c.b16 %v333, %v329
    %v442 = vpack.c.b16 %v338, %v334
    %v443 = vpack.c.b16 %v339, %v335
    %v444 = vpack.c.b16 %v340, %v336
    %v445 = vpack.c.b16 %v341, %v337
    %v446 = vpack.c.b16 %v346, %v342
    %v447 = vpack.c.b16 %v347, %v343
    %v448 = vpack.c.b16 %v348, %v344
    %v449 = vpack.c.b16 %v349, %v345
    %v450 = vpack.c.b16 %v354, %v350
    %v451 = vpack.c.b16 %v355, %v351
    %v452 = vpack.c.b16 %v356, %v352
    %v453 = vpack.c.b16 %v357, %v353
    %v454 = vpack.c.b16 %v362, %v358
    %v455 = vpack.c.b16 %v363, %v359
    %v456 = vpack.c.b16 %v364, %v360
    %v457 = vpack.c.b16 %v365, %v361
    %v458 = vpack.c.b16 %v370, %v366
    %v459 = vpack.c.b16 %v371, %v367
    %v460 = vpack.c.b16 %v372, %v368
    %v461 = vpack.c.b16 %v373, %v369
    %v462 = vpack.c.b16 %v378, %v374
    %v463 = vpack.c.b16 %v379, %v375
    %v464 = vpack.c.b16 %v380, %v376
    %v465 = vpack.c.b16 %v381, %v377
    %v466 = vpack.c.b16 %v386, %v382
    %v467 = vpack.c.b16 %v387, %v383
    %v468 = vpack.c.b16 %v388, %v384
    %v469 = vpack.c.b16 %v389, %v385
    %v470 = vpack.c.b16 %v394, %v390
    %v471 = vpack.c.b16 %v395, %v391
    %v472 = vpack.c.b16 %v396, %v392
    %v473 = vpack.c.b16 %v397, %v393
    %v474 = vpack.c.b16 %v402, %v398
    %v475 = vpack.c.b16 %v403, %v399
    %v476 = vpack.c.b16 %v404, %v400
    %v477 = vpack.c.b16 %v405, %v401
    %v478 = vpack.c.b16 %v410, %v406
    %v479 = vpack.c.b16 %v411, %v407
    %v480 = vpack.c.b16 %v412, %v408
    %v481 = vpack.c.b16 %v413, %v409
    %v482 = vpack.c.b16 %v418, %v414
    %v483 = vpack.c.b16 %v419, %v415
    %v484 = vpack.c.b16 %v420, %v416
    %v485 = vpack.c.b16 %v421, %v417
    %550 = vmatprep.subr.bf16.mxu0 %v451
    %551 = vmatpush1.bf16.msra.mxu0 %v450
    %552 = vmatprep.subr.bf16.mxu0 %v447
    %553 = vmatpush1.bf16.msra.mxu0 %v446
    %554 = vmatprep.subr.bf16.mxu0 %v443
    %555 = vmatpush1.bf16.msra.mxu0 %v442
    %556 = vmatprep.subr.bf16.mxu0 %v439
    %557 = vmatpush1.bf16.msra.mxu0 %v438
    %558 = vmatprep.subr.bf16.mxu0 %v435
    %559 = vmatpush1.bf16.msra.mxu0 %v434
    %560 = vmatprep.subr.bf16.mxu0 %v431
    %561 = vmatpush1.bf16.msra.mxu0 %v430
    %562 = vmatprep.subr.bf16.mxu0 %v427
    %563 = vmatpush1.bf16.msra.mxu0 %v426
    %564 = vmatprep.subr.bf16.mxu0 %v423
    %565 = vmatpush1.bf16.msra.mxu0 %v422
    %566 = vmatprep.subr.bf16.mxu0 %v483
    %567 = vmatpush2.bf16.msra.mxu0 %v482
    %568 = vmatprep.subr.bf16.mxu0 %v479
    %569 = vmatpush2.bf16.msra.mxu0 %v478
    %570 = vmatprep.subr.bf16.mxu0 %v475
    %571 = vmatpush2.bf16.msra.mxu0 %v474
    %572 = vmatprep.subr.bf16.mxu0 %v471
    %573 = vmatpush2.bf16.msra.mxu0 %v470
    %574 = vmatprep.subr.bf16.mxu0 %v467
    %575 = vmatpush2.bf16.msra.mxu0 %v466
    %576 = vmatprep.subr.bf16.mxu0 %v463
    %577 = vmatpush2.bf16.msra.mxu0 %v462
    %578 = vmatprep.subr.bf16.mxu0 %v459
    %579 = vmatpush2.bf16.msra.mxu0 %v458
    %580 = vmatprep.subr.bf16.mxu0 %v455
    %581 = vmatpush2.bf16.msra.mxu0 %v454
    %582 = vmatprep.mubr.bf16.mxu0 %v143
    %583 = vmatmul.mubr.bf16.gmra.mxu0 %v142
    %v584 = vpop.f32.mrf.mxu0
    %v585 = vadd.f32 %v213, %v584
    %v586 = vpop.f32.mrf.mxu0
    %v587 = vadd.f32 %v217, %v586
    %v588 = vpop.f32.mrf.mxu0
    %v589 = vpop.f32.mrf.mxu0
    %590 = vdwg.mxu0
    %591 = vmatprep.subr.bf16.mxu0 %v453
    %592 = vmatpush1.bf16.msra.mxu0 %v452
    %593 = vmatprep.subr.bf16.mxu0 %v449
    %594 = vmatpush1.bf16.msra.mxu0 %v448
    %595 = vmatprep.subr.bf16.mxu0 %v445
    %596 = vmatpush1.bf16.msra.mxu0 %v444
    %597 = vmatprep.subr.bf16.mxu0 %v441
    %598 = vmatpush1.bf16.msra.mxu0 %v440
    %599 = vmatprep.subr.bf16.mxu0 %v437
    %600 = vmatpush1.bf16.msra.mxu0 %v436
    %601 = vmatprep.subr.bf16.mxu0 %v433
    %602 = vmatpush1.bf16.msra.mxu0 %v432
    %603 = vmatprep.subr.bf16.mxu0 %v429
    %604 = vmatpush1.bf16.msra.mxu0 %v428
    %605 = vmatprep.subr.bf16.mxu0 %v425
    %606 = vmatpush1.bf16.msra.mxu0 %v424
    %607 = vmatprep.subr.bf16.mxu0 %v485
    %608 = vmatpush2.bf16.msra.mxu0 %v484
    %609 = vmatprep.subr.bf16.mxu0 %v481
    %610 = vmatpush2.bf16.msra.mxu0 %v480
    %611 = vmatprep.subr.bf16.mxu0 %v477
    %612 = vmatpush2.bf16.msra.mxu0 %v476
    %613 = vmatprep.subr.bf16.mxu0 %v473
    %614 = vmatpush2.bf16.msra.mxu0 %v472
    %615 = vmatprep.subr.bf16.mxu0 %v469
    %616 = vmatpush2.bf16.msra.mxu0 %v468
    %617 = vmatprep.subr.bf16.mxu0 %v465
    %618 = vmatpush2.bf16.msra.mxu0 %v464
    %619 = vmatprep.subr.bf16.mxu0 %v461
    %620 = vmatpush2.bf16.msra.mxu0 %v460
    %621 = vmatprep.subr.bf16.mxu0 %v457
    %622 = vmatpush2.bf16.msra.mxu0 %v456
    %623 = vmatprep.mubr.bf16.mxu0 %v143
    %624 = vmatmul.mubr.bf16.gmra.mxu0 %v142
    %v625 = vpop.f32.mrf.mxu0
    %v626 = vadd.f32 %v221, %v625
    %v627 = vpop.f32.mrf.mxu0
    %v628 = vadd.f32 %v225, %v627
    %v629 = vpop.f32.mrf.mxu0
    %v630 = vpop.f32.mrf.mxu0
    %631 = vdwg.mxu0
    %v632 = vmax.f32 %v585, 0.0
    %v633 = vmax.f32 %v587, 0.0
    %v634 = vmax.f32 %v626, 0.0
    %v635 = vmax.f32 %v628, 0.0
    %v636 = vpack.c.bf16 %v632, %v632
    %v637 = vpack.c.bf16 %v633, %v633
    %v638 = vpack.c.bf16 %v634, %v634
    %v639 = vpack.c.bf16 %v635, %v635
    %v640 = vld [vmem:[#allocation5] sm:$0xf]
    %v641 = vld [vmem:[#allocation5 + $0x4] sm:$0xf]
    %v642 = vld [vmem:[#allocation5 + $0x8] sm:$0xf]
    %v643 = vld [vmem:[#allocation5 + $0xc] sm:$0xf]
    %v644 = vld [vmem:[#allocation5 + $0x10] sm:$0xf]
    %v645 = vld [vmem:[#allocation5 + $0x14] sm:$0xf]
    %v646 = vld [vmem:[#allocation5 + $0x18] sm:$0xf]
    %v647 = vld [vmem:[#allocation5 + $0x1c] sm:$0xf]
    %v648 = vld [vmem:[#allocation5 + $0x20] sm:$0xf]
    %v649 = vld [vmem:[#allocation5 + $0x24] sm:$0xf]
    %v650 = vld [vmem:[#allocation5 + $0x28] sm:$0xf]
    %v651 = vld [vmem:[#allocation5 + $0x2c] sm:$0xf]
    %v652 = vld [vmem:[#allocation5 + $0x30] sm:$0xf]
    %v653 = vld [vmem:[#allocation5 + $0x34] sm:$0xf]
    %v654 = vld [vmem:[#allocation5 + $0x38] sm:$0xf]
    %v655 = vld [vmem:[#allocation5 + $0x3c] sm:$0xf]
    %v656 = vld [vmem:[#allocation5 + $0x40] sm:$0xf]
    %v657 = vld [vmem:[#allocation5 + $0x44] sm:$0xf]
    %v658 = vld [vmem:[#allocation5 + $0x48] sm:$0xf]
    %v659 = vld [vmem:[#allocation5 + $0x4c] sm:$0xf]
    %v660 = vld [vmem:[#allocation5 + $0x50] sm:$0xf]
    %v661 = vld [vmem:[#allocation5 + $0x54] sm:$0xf]
    %v662 = vld [vmem:[#allocation5 + $0x58] sm:$0xf]
    %v663 = vld [vmem:[#allocation5 + $0x5c] sm:$0xf]
    %v664 = vld [vmem:[#allocation5 + $0x60] sm:$0xf]
    %v665 = vld [vmem:[#allocation5 + $0x64] sm:$0xf]
    %v666 = vld [vmem:[#allocation5 + $0x68] sm:$0xf]
    %v667 = vld [vmem:[#allocation5 + $0x6c] sm:$0xf]
    %v668 = vld [vmem:[#allocation5 + $0x70] sm:$0xf]
    %v669 = vld [vmem:[#allocation5 + $0x74] sm:$0xf]
    %v670 = vld [vmem:[#allocation5 + $0x78] sm:$0xf]
    %v671 = vld [vmem:[#allocation5 + $0x7c] sm:$0xf]
    %v672 = vld [vmem:[#allocation5 + $0x80] sm:$0xf]
    %v673 = vld [vmem:[#allocation5 + $0x84] sm:$0xf]
    %v674 = vld [vmem:[#allocation5 + $0x88] sm:$0xf]
    %v675 = vld [vmem:[#allocation5 + $0x8c] sm:$0xf]
    %v676 = vld [vmem:[#allocation5 + $0x90] sm:$0xf]
    %v677 = vld [vmem:[#allocation5 + $0x94] sm:$0xf]
    %v678 = vld [vmem:[#allocation5 + $0x98] sm:$0xf]
    %v679 = vld [vmem:[#allocation5 + $0x9c] sm:$0xf]
    %v680 = vld [vmem:[#allocation5 + $0xa0] sm:$0xf]
    %v681 = vld [vmem:[#allocation5 + $0xa4] sm:$0xf]
    %v682 = vld [vmem:[#allocation5 + $0xa8] sm:$0xf]
    %v683 = vld [vmem:[#allocation5 + $0xac] sm:$0xf]
    %v684 = vld [vmem:[#allocation5 + $0xb0] sm:$0xf]
    %v685 = vld [vmem:[#allocation5 + $0xb4] sm:$0xf]
    %v686 = vld [vmem:[#allocation5 + $0xb8] sm:$0xf]
    %v687 = vld [vmem:[#allocation5 + $0xbc] sm:$0xf]
    %v688 = vld [vmem:[#allocation5 + $0xc0] sm:$0xf]
    %v689 = vld [vmem:[#allocation5 + $0xc4] sm:$0xf]
    %v690 = vld [vmem:[#allocation5 + $0xc8] sm:$0xf]
    %v691 = vld [vmem:[#allocation5 + $0xcc] sm:$0xf]
    %v692 = vld [vmem:[#allocation5 + $0xd0] sm:$0xf]
    %v693 = vld [vmem:[#allocation5 + $0xd4] sm:$0xf]
    %v694 = vld [vmem:[#allocation5 + $0xd8] sm:$0xf]
    %v695 = vld [vmem:[#allocation5 + $0xdc] sm:$0xf]
    %v696 = vld [vmem:[#allocation5 + $0xe0] sm:$0xf]
    %v697 = vld [vmem:[#allocation5 + $0xe4] sm:$0xf]
    %v698 = vld [vmem:[#allocation5 + $0xe8] sm:$0xf]
    %v699 = vld [vmem:[#allocation5 + $0xec] sm:$0xf]
    %v700 = vld [vmem:[#allocation5 + $0xf0] sm:$0xf]
    %v701 = vld [vmem:[#allocation5 + $0xf4] sm:$0xf]
    %v702 = vld [vmem:[#allocation5 + $0xf8] sm:$0xf]
    %v703 = vld [vmem:[#allocation5 + $0xfc] sm:$0xf]
    %v704 = vld [vmem:[%s6] sm:$0x1]
    %v706 = vlaneseq
    %v707 = vshrl.u32 %v706, 7
    %v708 = vsub.s32 0, %v707
    %v709 = vrot.slane %v704, %v708
    %v775 = vunpack.c.l.b16 %v640
    %v776 = vunpack.c.l.b16 %v641
    %v777 = vunpack.c.l.b16 %v642
    %v778 = vunpack.c.l.b16 %v643
    %v779 = vunpack.c.l.b16 %v644
    %v780 = vunpack.c.l.b16 %v645
    %v781 = vunpack.c.l.b16 %v646
    %v782 = vunpack.c.l.b16 %v647
    %v783 = vunpack.c.l.b16 %v648
    %v784 = vunpack.c.l.b16 %v649
    %v785 = vunpack.c.l.b16 %v650
    %v786 = vunpack.c.l.b16 %v651
    %v787 = vunpack.c.l.b16 %v652
    %v788 = vunpack.c.l.b16 %v653
    %v789 = vunpack.c.l.b16 %v654
    %v790 = vunpack.c.l.b16 %v655
    %v791 = vunpack.c.l.b16 %v656
    %v792 = vunpack.c.l.b16 %v657
    %v793 = vunpack.c.l.b16 %v658
    %v794 = vunpack.c.l.b16 %v659
    %v795 = vunpack.c.l.b16 %v660
    %v796 = vunpack.c.l.b16 %v661
    %v797 = vunpack.c.l.b16 %v662
    %v798 = vunpack.c.l.b16 %v663
    %v799 = vunpack.c.l.b16 %v664
    %v800 = vunpack.c.l.b16 %v665
    %v801 = vunpack.c.l.b16 %v666
    %v802 = vunpack.c.l.b16 %v667
    %v803 = vunpack.c.l.b16 %v668
    %v804 = vunpack.c.l.b16 %v669
    %v805 = vunpack.c.l.b16 %v670
    %v806 = vunpack.c.l.b16 %v671
    %v807 = vunpack.c.l.b16 %v672
    %v808 = vunpack.c.l.b16 %v673
    %v809 = vunpack.c.l.b16 %v674
    %v810 = vunpack.c.l.b16 %v675
    %v811 = vunpack.c.l.b16 %v676
    %v812 = vunpack.c.l.b16 %v677
    %v813 = vunpack.c.l.b16 %v678
    %v814 = vunpack.c.l.b16 %v679
    %v815 = vunpack.c.l.b16 %v680
    %v816 = vunpack.c.l.b16 %v681
    %v817 = vunpack.c.l.b16 %v682
    %v818 = vunpack.c.l.b16 %v683
    %v819 = vunpack.c.l.b16 %v684
    %v820 = vunpack.c.l.b16 %v685
    %v821 = vunpack.c.l.b16 %v686
    %v822 = vunpack.c.l.b16 %v687
    %v823 = vunpack.c.l.b16 %v688
    %v824 = vunpack.c.l.b16 %v689
    %v825 = vunpack.c.l.b16 %v690
    %v826 = vunpack.c.l.b16 %v691
    %v827 = vunpack.c.l.b16 %v692
    %v828 = vunpack.c.l.b16 %v693
    %v829 = vunpack.c.l.b16 %v694
    %v830 = vunpack.c.l.b16 %v695
    %v831 = vunpack.c.l.b16 %v696
    %v832 = vunpack.c.l.b16 %v697
    %v833 = vunpack.c.l.b16 %v698
    %v834 = vunpack.c.l.b16 %v699
    %v835 = vunpack.c.l.b16 %v700
    %v836 = vunpack.c.l.b16 %v701
    %v837 = vunpack.c.l.b16 %v702
    %v838 = vunpack.c.l.b16 %v703
    %v839 = vpack.c.b16 %v776, %v775
    %v840 = vpack.c.b16 %v778, %v777
    %v841 = vpack.c.b16 %v780, %v779
    %v842 = vpack.c.b16 %v782, %v781
    %v843 = vpack.c.b16 %v784, %v783
    %v844 = vpack.c.b16 %v786, %v785
    %v845 = vpack.c.b16 %v788, %v787
    %v846 = vpack.c.b16 %v790, %v789
    %v847 = vpack.c.b16 %v792, %v791
    %v848 = vpack.c.b16 %v794, %v793
    %v849 = vpack.c.b16 %v796, %v795
    %v850 = vpack.c.b16 %v798, %v797
    %v851 = vpack.c.b16 %v800, %v799
    %v852 = vpack.c.b16 %v802, %v801
    %v853 = vpack.c.b16 %v804, %v803
    %v854 = vpack.c.b16 %v806, %v805
    %v855 = vpack.c.b16 %v808, %v807
    %v856 = vpack.c.b16 %v810, %v809
    %v857 = vpack.c.b16 %v812, %v811
    %v858 = vpack.c.b16 %v814, %v813
    %v859 = vpack.c.b16 %v816, %v815
    %v860 = vpack.c.b16 %v818, %v817
    %v861 = vpack.c.b16 %v820, %v819
    %v862 = vpack.c.b16 %v822, %v821
    %v863 = vpack.c.b16 %v824, %v823
    %v864 = vpack.c.b16 %v826, %v825
    %v865 = vpack.c.b16 %v828, %v827
    %v866 = vpack.c.b16 %v830, %v829
    %v867 = vpack.c.b16 %v832, %v831
    %v868 = vpack.c.b16 %v834, %v833
    %v869 = vpack.c.b16 %v836, %v835
    %v870 = vpack.c.b16 %v838, %v837
    %903 = vmatprep.subr.bf16.mxu0 0
    %904 = vmatpush1.bf16.msra.mxu0 %v846
    %905 = vmatprep.subr.bf16.mxu0 0
    %906 = vmatpush1.bf16.msra.mxu0 %v845
    %907 = vmatprep.subr.bf16.mxu0 0
    %908 = vmatpush1.bf16.msra.mxu0 %v844
    %909 = vmatprep.subr.bf16.mxu0 0
    %910 = vmatpush1.bf16.msra.mxu0 %v843
    %911 = vmatprep.subr.bf16.mxu0 0
    %912 = vmatpush1.bf16.msra.mxu0 %v842
    %913 = vmatprep.subr.bf16.mxu0 0
    %914 = vmatpush1.bf16.msra.mxu0 %v841
    %915 = vmatprep.subr.bf16.mxu0 0
    %916 = vmatpush1.bf16.msra.mxu0 %v840
    %917 = vmatprep.subr.bf16.mxu0 0
    %918 = vmatpush1.bf16.msra.mxu0 %v839
    %919 = vmatprep.subr.bf16.mxu0 0
    %920 = vmatpush2.bf16.msra.mxu0 %v854
    %921 = vmatprep.subr.bf16.mxu0 0
    %922 = vmatpush2.bf16.msra.mxu0 %v853
    %923 = vmatprep.subr.bf16.mxu0 0
    %924 = vmatpush2.bf16.msra.mxu0 %v852
    %925 = vmatprep.subr.bf16.mxu0 0
    %926 = vmatpush2.bf16.msra.mxu0 %v851
    %927 = vmatprep.subr.bf16.mxu0 0
    %928 = vmatpush2.bf16.msra.mxu0 %v850
    %929 = vmatprep.subr.bf16.mxu0 0
    %930 = vmatpush2.bf16.msra.mxu0 %v849
    %931 = vmatprep.subr.bf16.mxu0 0
    %932 = vmatpush2.bf16.msra.mxu0 %v848
    %933 = vmatprep.subr.bf16.mxu0 0
    %934 = vmatpush2.bf16.msra.mxu0 %v847
    %935 = vmatprep.mubr.bf16.mxu0 %v637
    %936 = vmatmul.mubr.bf16.gmra.mxu0 %v636
    %v937 = vpop.f32.mrf.mxu0
    %v938 = vadd.f32 %v709, %v937
    %v939 = vpop.f32.mrf.mxu0
    %v940 = vpop.f32.mrf.mxu0
    %v941 = vpop.f32.mrf.mxu0
    %942 = vdwg.mxu0
    %943 = vmatprep.subr.bf16.mxu0 0
    %944 = vmatpush1.bf16.msra.mxu0 %v862
    %945 = vmatprep.subr.bf16.mxu0 0
    %946 = vmatpush1.bf16.msra.mxu0 %v861
    %947 = vmatprep.subr.bf16.mxu0 0
    %948 = vmatpush1.bf16.msra.mxu0 %v860
    %949 = vmatprep.subr.bf16.mxu0 0
    %950 = vmatpush1.bf16.msra.mxu0 %v859
    %951 = vmatprep.subr.bf16.mxu0 0
    %952 = vmatpush1.bf16.msra.mxu0 %v858
    %953 = vmatprep.subr.bf16.mxu0 0
    %954 = vmatpush1.bf16.msra.mxu0 %v857
    %955 = vmatprep.subr.bf16.mxu0 0
    %956 = vmatpush1.bf16.msra.mxu0 %v856
    %957 = vmatprep.subr.bf16.mxu0 0
    %958 = vmatpush1.bf16.msra.mxu0 %v855
    %959 = vmatprep.subr.bf16.mxu0 0
    %960 = vmatpush2.bf16.msra.mxu0 %v870
    %961 = vmatprep.subr.bf16.mxu0 0
    %962 = vmatpush2.bf16.msra.mxu0 %v869
    %963 = vmatprep.subr.bf16.mxu0 0
    %964 = vmatpush2.bf16.msra.mxu0 %v868
    %965 = vmatprep.subr.bf16.mxu0 0
    %966 = vmatpush2.bf16.msra.mxu0 %v867
    %967 = vmatprep.subr.bf16.mxu0 0
    %968 = vmatpush2.bf16.msra.mxu0 %v866
    %969 = vmatprep.subr.bf16.mxu0 0
    %970 = vmatpush2.bf16.msra.mxu0 %v865
    %971 = vmatprep.subr.bf16.mxu0 0
    %972 = vmatpush2.bf16.msra.mxu0 %v864
    %973 = vmatprep.subr.bf16.mxu0 0
    %974 = vmatpush2.bf16.msra.mxu0 %v863
    %975 = vmatprep.mubr.bf16.mxu0 %v639
    %976 = vmatmul.mubr.bf16.gmra.mxu0 %v638
    %v977 = vpop.f32.mrf.mxu0
    %v978 = vadd.f32 %v938, %v977
    %v979 = vpop.f32.mrf.mxu0
    %v980 = vpop.f32.mrf.mxu0
    %v981 = vpop.f32.mrf.mxu0
    %982 = vdwg.mxu0
    %v983 = vmax.f32 %v978, 0.0
    %v984 = vpack.c.bf16 %v983, %v983
    %v985 = vld [vmem:[%s7] sm:$0xf]
    %v986 = vld [vmem:[%s7 + $0x4] sm:$0xf]
    %v987 = vld [vmem:[%s7 + $0x8] sm:$0xf]
    %v988 = vld [vmem:[%s7 + $0xc] sm:$0xf]
    %v989 = vld [vmem:[%s7 + $0x10] sm:$0xf]
    %v990 = vld [vmem:[%s7 + $0x14] sm:$0xf]
    %v991 = vld [vmem:[%s7 + $0x18] sm:$0xf]
    %v992 = vld [vmem:[%s7 + $0x1c] sm:$0xf]
    %v993 = vld [vmem:[%s7 + $0x20] sm:$0xf]
    %v994 = vld [vmem:[%s7 + $0x24] sm:$0xf]
    %v995 = vld [vmem:[%s7 + $0x28] sm:$0xf]
    %v996 = vld [vmem:[%s7 + $0x2c] sm:$0xf]
    %v997 = vld [vmem:[%s7 + $0x30] sm:$0xf]
    %v998 = vld [vmem:[%s7 + $0x34] sm:$0xf]
    %v999 = vld [vmem:[%s7 + $0x38] sm:$0xf]
    %v1000 = vld [vmem:[%s7 + $0x3c] sm:$0xf]
    %v1001 = vld [vmem:[%s8] sm:$0x1]
    %v1003 = vlaneseq
    %v1004 = vshrl.u32 %v1003, 7
    %v1005 = vsub.s32 0, %v1004
    %v1006 = vrot.slane %v1001, %v1005
    %v1024 = vunpack.c.l.b16 %v985
    %v1025 = vunpack.c.l.b16 %v986
    %v1026 = vunpack.c.l.b16 %v987
    %v1027 = vunpack.c.l.b16 %v988
    %v1028 = vunpack.c.l.b16 %v989
    %v1029 = vunpack.c.l.b16 %v990
    %v1030 = vunpack.c.l.b16 %v991
    %v1031 = vunpack.c.l.b16 %v992
    %v1032 = vunpack.c.l.b16 %v993
    %v1033 = vunpack.c.l.b16 %v994
    %v1034 = vunpack.c.l.b16 %v995
    %v1035 = vunpack.c.l.b16 %v996
    %v1036 = vunpack.c.l.b16 %v997
    %v1037 = vunpack.c.l.b16 %v998
    %v1038 = vunpack.c.l.b16 %v999
    %v1039 = vunpack.c.l.b16 %v1000
    %v1040 = vpack.c.b16 %v1025, %v1024
    %v1041 = vpack.c.b16 %v1027, %v1026
    %v1042 = vpack.c.b16 %v1029, %v1028
    %v1043 = vpack.c.b16 %v1031, %v1030
    %v1044 = vpack.c.b16 %v1033, %v1032
    %v1045 = vpack.c.b16 %v1035, %v1034
    %v1046 = vpack.c.b16 %v1037, %v1036
    %v1047 = vpack.c.b16 %v1039, %v1038
    %1056 = vmatprep.subr.bf16.mxu0 0
    %1057 = vmatpush1.bf16.msra.mxu0 %v1047
    %1058 = vmatprep.subr.bf16.mxu0 0
    %1059 = vmatpush1.bf16.msra.mxu0 %v1046
    %1060 = vmatprep.subr.bf16.mxu0 0
    %1061 = vmatpush1.bf16.msra.mxu0 %v1045
    %1062 = vmatprep.subr.bf16.mxu0 0
    %1063 = vmatpush1.bf16.msra.mxu0 %v1044
    %1064 = vmatprep.subr.bf16.mxu0 0
    %1065 = vmatpush1.bf16.msra.mxu0 %v1043
    %1066 = vmatprep.subr.bf16.mxu0 0
    %1067 = vmatpush1.bf16.msra.mxu0 %v1042
    %1068 = vmatprep.subr.bf16.mxu0 0
    %1069 = vmatpush1.bf16.msra.mxu0 %v1041
    %1070 = vmatprep.subr.bf16.mxu0 0
    %1071 = vmatpush1.bf16.msra.mxu0 %v1040
    %1072 = vmatprep.subr.bf16.mxu0 0
    %1073 = vmatpush2.bf16.msra.mxu0 0
    %1074 = vmatprep.subr.bf16.mxu0 0
    %1075 = vmatpush2.bf16.msra.mxu0 0
    %1076 = vmatprep.subr.bf16.mxu0 0
    %1077 = vmatpush2.bf16.msra.mxu0 0
    %1078 = vmatprep.subr.bf16.mxu0 0
    %1079 = vmatpush2.bf16.msra.mxu0 0
    %1080 = vmatprep.subr.bf16.mxu0 0
    %1081 = vmatpush2.bf16.msra.mxu0 0
    %1082 = vmatprep.subr.bf16.mxu0 0
    %1083 = vmatpush2.bf16.msra.mxu0 0
    %1084 = vmatprep.subr.bf16.mxu0 0
    %1085 = vmatpush2.bf16.msra.mxu0 0
    %1086 = vmatprep.subr.bf16.mxu0 0
    %1087 = vmatpush2.bf16.msra.mxu0 0
    %1088 = vmatprep.mubr.bf16.mxu0 0
    %1089 = vmatmul.mubr.bf16.gmra.mxu0 %v984
    %v1090 = vpop.f32.mrf.mxu0
    %v1091 = vadd.f32 %v1006, %v1090
    %v1092 = vpop.f32.mrf.mxu0
    %v1093 = vpop.f32.mrf.mxu0
    %v1094 = vpop.f32.mrf.mxu0
    %1095 = vdwg.mxu0
    %v1096 = vmax.f32 %v1091, 0.0
    %v1097 = vld [vmem:[%s9] sm:$0x1]
    %v1099 = vlaneseq
    %v1100 = vshrl.u32 %v1099, 7
    %v1101 = vsub.s32 0, %v1100
    %v1102 = vrot.slane %v1097, %v1101
    %v1104 = vmul.f32 %v1096, %v1102
    %vm1105 = vcmask 517120
    %v1106 = vsel %vm1105, %v1104, 0.0
    %1107 = vadd.xlane.f32.xlu0 %v1106
    %v1108 = vpop.xlane.xlu0 %1107
    %v1109 = vld [vmem:[#allocation2] sm:$0x1]
    %v1111 = vlaneseq
    %v1112 = vshrl.u32 %v1111, 7
    %v1113 = vsub.s32 0, %v1112
    %v1114 = vrot.slane %v1109, %v1113
    %v1116 = vadd.f32 %v1108, %v1114
    %v1117 = vsub.f32 0.0, %v1116
    %v1118 = vmul.f32 %v1117, 1.442695
    %v1119 = vpow.pop %v1118
    %v1120 = vadd.f32 %v1119, 1.0
    %v1121 = vrcp.pop %v1120
    %v1122 = vmul.f32 1.0, %v1121
    %v1123 = vmul.f32 %v1116, 1.442695
    %v1124 = vpow.pop %v1123
    %v1125 = vadd.f32 %v1124, 1.0
    %v1126 = vrcp.pop %v1125
    %v1127 = vmul.f32 %v1124, %v1126
    %vm1128 = vcmp.ge.f32.partialorder %v1116, 0.0
    %v1129 = vsel %vm1128, %v1122, %v1127
    %vm1130 = vcmask 1024
    %1131 = vst.msk [vmem:[%s11] sm:$0x3] %vm1130, %v1129
    // Predicated region
    $region54: #{simple_cnn_forward.1} parent=1 // pred_check
      _
    $region55: #{simple_cnn_forward.1} parent=1 // pred_check_branch
      %1133 = sbr.rel (0) target = $region57
    $region56: #{simple_cnn_forward.1} parent=1 // pred_region
      _
    $region57: #{simple_cnn_forward.1} parent=1 // pred_fallthru
      _
    // Predicated region
    $region58: #{simple_cnn_forward.1} parent=1 // pred_check
      _
    $region59: #{simple_cnn_forward.1} parent=1 // pred_check_branch
      %1135 = sbr.rel (0) target = $region61
    $region60: #{simple_cnn_forward.1} parent=1 // pred_region
      _
    $region61: #{simple_cnn_forward.1} parent=1 // pred_fallthru
      _
    %1136 = vsyncpa [#allocation4], 1
    %1137 = vsyncpa [#allocation6], 1

</llo_original>
